<compile_context>
chip_gen: v7x
topology: tpu7x:2x2x1
jax: 0.10.0
libtpu: 0.0.40
codegen_flags: <defaults>
</compile_context>

<pallas_src>
import jax
import jax.numpy as jnp
from jax.experimental import pallas as pl
from jax.experimental.pallas import tpu as pltpu


def _silu_kernel(x_ref, o_ref):
    # Elementwise y = x * sigmoid(x).
    # exp -> EUP, approx reciprocal -> EUP (separate bundle slot), mul -> VPU.
    xf = x_ref[...].astype(jnp.float32)
    sig = pl.reciprocal(1.0 + jnp.exp(-xf), approx=True)
    o_ref[...] = (xf * sig).astype(o_ref.dtype)


_LANE_CANDIDATES = (1024, 512, 256, 128)
_TARGET_BLOCK_BYTES = 2 * 1024 * 1024   # ~2 MiB blocks (85%+ of HBM roofline)
_MIN_BLOCK_BYTES = 1 * 1024 * 1024      # never shrink below ~1 MiB for step-count reasons


def _row_multiple(dtype):
    # Sublane packing multiple: 8 for 32-bit, 16 for bf16, 32 for int8.
    itemsize = jnp.dtype(dtype).itemsize
    return 8 * max(1, 4 // itemsize)


def _pallas_silu_2d(x2d, *, donate=False):
    rows, lanes = x2d.shape
    itemsize = jnp.dtype(x2d.dtype).itemsize
    mult = _row_multiple(x2d.dtype)
    row_bytes = lanes * itemsize

    # Row tile targeting ~2 MiB per block.
    tr = max(mult, (_TARGET_BLOCK_BYTES // row_bytes) // mult * mult)

    # Allow a 2-way split (one block per v7x TensorCore) only if each half is
    # still >= ~1 MiB.  Harmless on single-TC v5e/v6e (blocks stay >= 1 MiB).
    half = -(-rows // 2)
    half = -(-half // mult) * mult
    if half * row_bytes >= _MIN_BLOCK_BYTES:
        tr = min(tr, half)

    # Prefer an even step count so both v7x TCs get equal work; never drop a
    # block below ~1 MiB to achieve it.
    steps = pl.cdiv(rows, tr)
    if steps > 1 and steps % 2 == 1:
        tr_even = -(-rows // (steps + 1))
        tr_even = -(-tr_even // mult) * mult
        if tr_even * row_bytes >= _MIN_BLOCK_BYTES:
            tr = tr_even

    if tr >= rows:
        # Single block covering the full row extent (full-extent dims are
        # exempt from the (8,128) divisibility constraint).
        tr = rows

    grid = (pl.cdiv(rows, tr),)  # ragged last block -> masked writes, handled by Pallas

    nelem = rows * lanes
    cost = pl.CostEstimate(
        flops=3 * nelem,                  # add, mul, mul (approximate)
        transcendentals=nelem,            # exp
        bytes_accessed=2 * nelem * itemsize,
    )

    extra = {}
    if donate:
        # Caller promises x2d can be overwritten; halves the op's HBM footprint.
        extra["input_output_aliases"] = {0: 0}

    return pl.pallas_call(
        _silu_kernel,
        out_shape=jax.ShapeDtypeStruct((rows, lanes), x2d.dtype),
        grid_spec=pltpu.PrefetchScalarGridSpec(
            num_scalar_prefetch=0,
            grid=grid,
            in_specs=[pl.BlockSpec((tr, lanes), lambda i: (i, 0))],
            out_specs=pl.BlockSpec((tr, lanes), lambda i: (i, 0)),
        ),
        compiler_params=pltpu.CompilerParams(
            dimension_semantics=("parallel",)),
        cost_estimate=cost,
        **extra,
    )(x2d)


def _jax_silu(x):
    xf = x.astype(jnp.float32)
    return (xf * jax.nn.sigmoid(xf)).astype(x.dtype)


def _lambda_silu_pallas(x, *, donate=False):
    orig_shape = x.shape
    n = x.size
    flat = x.reshape(-1)

    # Preferred path: flat size divides a wide lane count -> free reshape to a
    # lane-dense slab, fully unmasked stores, no pad / no slice / no copy.
    for lanes in _LANE_CANDIDATES:
        if n % lanes == 0:
            y = _pallas_silu_2d(flat.reshape(n // lanes, lanes), donate=donate)
            return y.reshape(orig_shape)

    # Ragged path: lane-dense main slab through the kernel, tiny (<1024 elem)
    # tail in plain JAX.  Keeps lane density (the biggest measured lever for
    # mem-bound kernels) instead of a sub-128 or (1, n) lane block.
    lanes = 1024 if n >= 1024 else 128
    main = (n // lanes) * lanes
    if main == 0:
        return _jax_silu(flat).reshape(orig_shape)
    head = _pallas_silu_2d(flat[:main].reshape(main // lanes, lanes)).reshape(-1)
    tail = _jax_silu(flat[main:])
    return jnp.concatenate([head, tail]).reshape(orig_shape)


def lambda_silu(x, *, min_pallas_elems=16384, donate=False):
    """Lambda(lambda x: x * sigmoid(x)) with a Pallas TPU elementwise kernel.

    For tiny activations (below `min_pallas_elems`) the plain JAX expression is
    returned so XLA can fuse it into the surrounding graph; the fixed
    pallas_call / layout overhead dominates at that size.  Set `donate=True`
    only when the caller can give up `x`'s buffer (output aliases input).
    """
    if x.size == 0:
        return x
    if x.size < min_pallas_elems:
        return x * jax.nn.sigmoid(x.astype(jnp.float32)).astype(x.dtype)
    return _lambda_silu_pallas(x, donate=donate)


if __name__ == "__main__":
    key = jax.random.PRNGKey(0)
    k1, k2, k3 = jax.random.split(key, 3)

    # (1) Canonical small NCHW input — force the Pallas path so the kernel runs.
    x1 = jax.random.normal(k1, (2, 4, 16, 16), dtype=jnp.float32)
    y1 = lambda_silu(x1, min_pallas_elems=0)
    jax.block_until_ready(y1)
    ref1 = x1 * jax.nn.sigmoid(x1)
    assert y1.shape == x1.shape and y1.dtype == x1.dtype
    assert jnp.allclose(y1, ref1, atol=5e-3, rtol=5e-3)

    # (2) Shape whose flat size is NOT a multiple of 128 -> exercises the
    #     lane-dense main-slab + plain-JAX-tail ragged path.
    x2 = jax.random.normal(k2, (3, 5, 24, 40), dtype=jnp.float32)
    y2 = lambda_silu(x2, min_pallas_elems=0)
    jax.block_until_ready(y2)
    ref2 = x2 * jax.nn.sigmoid(x2)
    assert y2.shape == x2.shape
    assert jnp.allclose(y2, ref2, atol=5e-3, rtol=5e-3)

    # (3) bf16 input — kernel upcasts to f32 internally, stores bf16.
    x3 = jax.random.normal(k3, (2, 4, 16, 16), dtype=jnp.bfloat16)
    y3 = lambda_silu(x3, min_pallas_elems=0)
    jax.block_until_ready(y3)
    x3f = x3.astype(jnp.float32)
    ref3 = (x3f * jax.nn.sigmoid(x3f)).astype(jnp.bfloat16)
    assert y3.dtype == jnp.bfloat16
    assert jnp.allclose(y3.astype(jnp.float32), ref3.astype(jnp.float32),
                        atol=2e-2, rtol=2e-2)

    # (4) Default small-input fallback (plain JAX, fused by XLA).
    y4 = lambda_silu(x1)
    jax.block_until_ready(y4)
    assert jnp.allclose(y4, ref1, atol=1e-5, rtol=1e-5)

    print("KERNEL_OK")
</pallas_src>

<mosaic_0001>
module attributes {stable_mosaic.version = 11 : i64} {
  func.func @_silu_kernel(%arg0: i32, %arg1: memref<2x1024xf32, #tpu.memory_space<vmem>>, %arg2: memref<2x1024xf32, #tpu.memory_space<vmem>>) attributes {dimension_semantics = [#tpu.dimension_semantics<parallel>], iteration_bounds = array<i64: 1>, scalar_prefetch = 0 : i64, scratch_operands = 0 : i64, tpu.core_type = #tpu.core_type<tc>, window_params = [{transform_indices = @transform_0, window_bounds = array<i64: 2, 1024>}, {transform_indices = @transform_1, window_bounds = array<i64: 2, 1024>}]} {
    %c0 = arith.constant 0 : index
    %c0_0 = arith.constant 0 : index
    %0 = vector.load %arg1[%c0, %c0_0] : memref<2x1024xf32, #tpu.memory_space<vmem>>, vector<2x1024xf32>
    %cst = arith.constant 0.000000e+00 : f32
    %1 = vector.broadcast %cst : f32 to vector<2x1024xf32>
    %2 = arith.subf %1, %0 : vector<2x1024xf32>
    %3 = math.exp %2 : vector<2x1024xf32>
    %cst_1 = arith.constant 1.000000e+00 : f32
    %4 = vector.broadcast %cst_1 : f32 to vector<2x1024xf32>
    %5 = arith.addf %4, %3 : vector<2x1024xf32>
    %6 = tpu.reciprocal %5 {approx = true} : vector<2x1024xf32> -> vector<2x1024xf32>
    %7 = arith.mulf %0, %6 : vector<2x1024xf32>
    %c0_2 = arith.constant 0 : index
    %c0_3 = arith.constant 0 : index
    %8 = vector.load %arg2[%c0_2, %c0_3] : memref<2x1024xf32, #tpu.memory_space<vmem>>, vector<2x1024xf32>
    tpu.vector_store %arg2[%c0_2, %c0_3], %7 {strides = array<i32>} : memref<2x1024xf32, #tpu.memory_space<vmem>>, vector<2x1024xf32>,
    return
  }
  func.func @transform_0(%arg0: i32) -> (i32, i32) {
    %c0_i32 = arith.constant 0 : i32
    %c0_i32_0 = arith.constant 0 : i32
    return %arg0, %c0_i32 : i32, i32
  }
  func.func @transform_1(%arg0: i32) -> (i32, i32) {
    %c0_i32 = arith.constant 0 : i32
    %c0_i32_0 = arith.constant 0 : i32
    return %arg0, %c0_i32 : i32, i32
  }
}

</mosaic_0001>

<llo_original>
// kernel: tpu_custom_call.1
$region0: #{tpu_custom_call.1}
  #allocation0 [shape = 'u32[]', space=smem, size = 0x4, offset = 0x4, fixed_abs, tag = 'smem constant byte address 0x4 - core index']
  #allocation1 [shape = 'u32[144,128]{1,0:T(1,128)}', space=vmem, size = 0x12000, scoped, tag = 'internal scratch']
  %s0 = inlined_call_operand.hbm [shape: f32[2,1024], index: 0, kind: input, shape index: {}]
  %s1 = inlined_call_operand.hbm [shape: f32[2,1024], index: 1, kind: output, shape index: {}]
  %s2 = sld [smem:[#allocation0]]
  $region18: #{tpu_custom_call.1} parent=0
    _
  %s4 = ssub.s32 1, %s2
  %s5 = scalar_select 0, %s4, %s2
  $region1: #{tpu_custom_call.1} parent=0
    #allocation2 [shape = 'u8[8192]{0}', space=vmem, size = 0x2000, scoped, tag = 'input window, operand 0, single buffered']
    #allocation3 [shape = 's32[1]{0}', space=sflag, size = 0x4, scoped, tag = 'scoped memory for tpu_custom_call.1']
    #allocation4 [shape = 's32[1]{0}', space=sflag, size = 0x4, scoped, tag = 'scoped memory for tpu_custom_call.1']
    #allocation5 [shape = 'u8[8192]{0}', space=vmem, size = 0x2000, scoped, tag = 'output window, operand 0, single buffered']
    %6 = vsyncpa [#allocation3], 0
    %7 = vsyncpa [#allocation4], 0
    // Predicated region
    $region2: #{tpu_custom_call.1} parent=1 // pred_check
      _
    $region3: #{tpu_custom_call.1} parent=1 // pred_check_branch
      %9 = sbr.rel (0) target = $region5
    $region4: #{tpu_custom_call.1} parent=1 // pred_region
      %s11 = ssub.s32 256, 256
      %12 = vsyncadd [#allocation3], %s11
      %s14 = sshll.u32 [#allocation2], 4
      %s15 = int_to_ptr.vmem [resolvable:$true] %s14
      %17 = dma.hbm_to_vmem [thread:$0]  %s0, 256, %s15, [#allocation3]
    $region5: #{tpu_custom_call.1} parent=1 // pred_fallthru
      _
    // Predicated region
    $region6: #{tpu_custom_call.1} parent=1 // pred_check
      _
    $region7: #{tpu_custom_call.1} parent=1 // pred_check_branch
      %19 = sbr.rel (0) target = $region9
    $region8: #{tpu_custom_call.1} parent=1 // pred_region
      %20 = dma.done [#allocation3], 256
    $region9: #{tpu_custom_call.1} parent=1 // pred_fallthru
      _
    %v21 = vld [vmem:[#allocation2] sm:$0xff]
    %v22 = vld [vmem:[#allocation2 + $0x8] sm:$0xff]
    %v23 = vsub.f32 0.0, %v21
    %v24 = vsub.f32 0.0, %v22
    %v25 = vmul.f32 %v23, 1.442695
    %v26 = vpow.pop %v25
    %v27 = vmul.f32 %v24, 1.442695
    %v28 = vpow.pop %v27
    %v29 = vadd.f32 %v26, 1.0
    %v30 = vadd.f32 %v28, 1.0
    %v31 = vrcp.pop %v29
    %v32 = vrcp.pop %v30
    %v33 = vmul.f32 %v21, %v31
    %v34 = vmul.f32 %v22, %v32
    %35 = vst [vmem:[#allocation5] sm:$0xff] %v33
    %36 = vst [vmem:[#allocation5 + $0x8] sm:$0xff] %v34
    // Predicated region
    $region10: #{tpu_custom_call.1} parent=1 // pred_check
      _
    $region11: #{tpu_custom_call.1} parent=1 // pred_check_branch
      %38 = sbr.rel (0) target = $region13
    $region12: #{tpu_custom_call.1} parent=1 // pred_region
      %s40 = ssub.s32 256, 256
      %41 = vsyncadd [#allocation4], %s40
      %s43 = sshll.u32 [#allocation5], 4
      %s44 = int_to_ptr.vmem [resolvable:$true] %s43
      %46 = dma.vmem_to_hbm [thread:$0]  %s44, 256, %s1, [#allocation4]
    $region13: #{tpu_custom_call.1} parent=1 // pred_fallthru
      _
    // Predicated region
    $region14: #{tpu_custom_call.1} parent=1 // pred_check
      _
    $region15: #{tpu_custom_call.1} parent=1 // pred_check_branch
      %48 = sbr.rel (0) target = $region17
    $region16: #{tpu_custom_call.1} parent=1 // pred_region
      %49 = dma.done [#allocation4], 256
    $region17: #{tpu_custom_call.1} parent=1 // pred_fallthru
      _
    %50 = vsyncpa [#allocation3], 1
    %51 = vsyncpa [#allocation4], 1

</llo_original>
